<compile_context>
chip_gen: v7x
topology: tpu7x:2x2x1
jax: 0.10.0
libtpu: 0.0.40
codegen_flags: <defaults>
</compile_context>

<pallas_src>
import functools

import jax
import jax.numpy as jnp
from jax.experimental import pallas as pl
from jax.experimental.pallas import tpu as pltpu

H1 = 512          # obs_net hidden width
H2 = 300          # out_net hidden width (logical)
H2_PAD = 384      # 300 padded to 3 * 128 lanes


def _round_up(x, m):
    return (x + m - 1) // m * m


def _choose_tb(batch, max_tb=1024, single_step_max=256):
    """Pick the batch tile.

    Small batches run as a single grid step (splitting them would be pure
    per-step overhead).  Larger batches are split into an even number of steps
    (so both v7x TensorCores get balanced work), each at most `max_tb` rows.
    """
    b8 = _round_up(batch, 8)
    if b8 <= single_step_max:
        return b8
    n_pairs = pl.cdiv(b8, 2 * max_tb)          # grid will be ~2 * n_pairs steps
    return _round_up(pl.cdiv(b8, 2 * n_pairs), 8)


def ddpg_critic_kernel(x_ref, a_ref,
                       w1_ref, b1_ref,
                       w2o_ref, w2a_ref, b2_ref,
                       w3_ref, b3_ref,
                       out_ref):
    # Activations arrive f32 from HBM; cast to bf16 on the VPU for the MXU.
    x = x_ref[...].astype(jnp.bfloat16)
    a = a_ref[...].astype(jnp.bfloat16)

    # Layer 1: obs = relu(x @ W1 + b1)                   (TB, 512), f32 accumulate
    obs = jnp.dot(x, w1_ref[...], preferred_element_type=jnp.float32)
    obs = jnp.maximum(obs + b1_ref[...], 0.0)

    # Layer 2: h = relu(obs @ W2o + a @ W2a + b2)        (TB, 384), concat folded.
    # Written as an explicit accumulation so the second dot's add can fold into
    # the MXU result pop instead of a separate (TB, 384) VPU add.
    h = jnp.dot(obs.astype(jnp.bfloat16), w2o_ref[...],
                preferred_element_type=jnp.float32)
    h = h + jnp.dot(a, w2a_ref[...], preferred_element_type=jnp.float32)
    h = jnp.maximum(h + b2_ref[...], 0.0)

    # Layer 3: Linear(300 -> 1) as VPU multiply + cross-lane (XLU) reduce; the
    # padded hidden columns are exactly zero so they contribute nothing.
    q = jnp.sum(h * w3_ref[...], axis=-1, keepdims=True) + b3_ref[0]

    out_ref[...] = q.astype(out_ref.dtype)


@functools.partial(jax.jit, static_argnames=("max_tb",))
def ddpg_critic(x, a, params, *, max_tb=1024):
    """x: (B, obs_size) f32, a: (B, act_size) f32 -> (B, 1) f32."""
    B, obs_size = x.shape
    act_size = a.shape[1]
    w1, b1, w2o, w2a, b2, w3_row, b3 = params

    TB = _choose_tb(B, max_tb)
    grid = (pl.cdiv(B, TB),)

    flops = 2 * B * (obs_size * H1 + (H1 + act_size) * H2_PAD + H2_PAD)
    bytes_accessed = (x.size * 4 + a.size * 4                     # f32 activations in
                      + (w1.size + w2o.size + w2a.size) * 2       # bf16 weights
                      + (b1.size + b2.size + w3_row.size + b3.size) * 4
                      + B * 4)                                    # (B, 1) f32 out

    out = pl.pallas_call(
        ddpg_critic_kernel,
        out_shape=jax.ShapeDtypeStruct((B, 1), jnp.float32),
        grid_spec=pltpu.PrefetchScalarGridSpec(
            num_scalar_prefetch=0,
            grid=grid,
            in_specs=[
                # batch-tiled activations (f32, no wrapper-side cast/pad copy)
                pl.BlockSpec((TB, obs_size), lambda i: (i, 0)),
                pl.BlockSpec((TB, act_size), lambda i: (i, 0)),
                # weights/biases: constant index_map -> VMEM-resident across grid
                pl.BlockSpec((obs_size, H1), lambda i: (0, 0)),
                pl.BlockSpec((1, H1), lambda i: (0, 0)),
                pl.BlockSpec((H1, H2_PAD), lambda i: (0, 0)),
                pl.BlockSpec((act_size, H2_PAD), lambda i: (0, 0)),
                pl.BlockSpec((1, H2_PAD), lambda i: (0, 0)),
                pl.BlockSpec((1, H2_PAD), lambda i: (0, 0)),
                # scalar output bias lives in SMEM (shape (1,))
                pl.BlockSpec(memory_space=pltpu.MemorySpace.SMEM),
            ],
            out_specs=pl.BlockSpec((TB, 1), lambda i: (i, 0)),
        ),
        compiler_params=pltpu.CompilerParams(
            dimension_semantics=("parallel",)),
        cost_estimate=pl.CostEstimate(
            flops=flops, transcendentals=0, bytes_accessed=bytes_accessed),
    )(x, a, w1, b1, w2o, w2a, b2, w3_row, b3)

    return out


# ----------------------------------------------------------------------------
# Parameter construction / preparation
# ----------------------------------------------------------------------------

def init_torch_style_params(key, obs_size, act_size):
    """Synthetic params in PyTorch nn.Linear layout: weight (out, in), bias (out,)."""
    k1, k2, k3, k4, k5, k6 = jax.random.split(key, 6)
    w1 = jax.random.normal(k1, (H1, obs_size), jnp.float32) / jnp.sqrt(obs_size)
    b1 = jax.random.normal(k2, (H1,), jnp.float32) * 0.01
    w2 = jax.random.normal(k3, (H2, H1 + act_size), jnp.float32) / jnp.sqrt(H1 + act_size)
    b2 = jax.random.normal(k4, (H2,), jnp.float32) * 0.01
    w3 = jax.random.normal(k5, (1, H2), jnp.float32) / jnp.sqrt(float(H2))
    b3 = jax.random.normal(k6, (1,), jnp.float32) * 0.01
    return (w1, b1, w2, b2, w3, b3)


def prepare_params(torch_params):
    """Transpose to (in, out), split W2 at the concat boundary, pad 300->384,
    cast weight matrices to bf16 (biases / w3 row stay f32, b3 stays (1,) f32)."""
    w1, b1, w2, b2, w3, b3 = torch_params
    pad = H2_PAD - H2

    w1_t = w1.T.astype(jnp.bfloat16)                                   # (obs, 512)
    b1_r = b1.reshape(1, H1).astype(jnp.float32)

    w2_t = jnp.pad(w2.T, ((0, 0), (0, pad)))                           # (512+act, 384)
    w2o = w2_t[:H1, :].astype(jnp.bfloat16)                            # (512, 384)
    w2a = w2_t[H1:, :].astype(jnp.bfloat16)                            # (act, 384)
    b2_r = jnp.pad(b2, (0, pad)).reshape(1, H2_PAD).astype(jnp.float32)

    w3_row = jnp.pad(w3.reshape(1, H2), ((0, 0), (0, pad))).astype(jnp.float32)  # (1, 384)
    b3_r = b3.reshape(1).astype(jnp.float32)                           # (1,), SMEM scalar
    return (w1_t, b1_r, w2o, w2a, b2_r, w3_row, b3_r)


# ----------------------------------------------------------------------------
# References
# ----------------------------------------------------------------------------

def reference_f32(x, a, torch_params):
    """Exact PyTorch-module semantics in pure f32 JAX."""
    w1, b1, w2, b2, w3, b3 = torch_params
    obs = jnp.maximum(x @ w1.T + b1, 0.0)
    cat = jnp.concatenate([obs, a], axis=1)
    h = jnp.maximum(cat @ w2.T + b2, 0.0)
    return h @ w3.T + b3


def reference_bf16(x, a, prep):
    """Pure-JAX reference mirroring the kernel's dtype handling (bf16 weights,
    bf16 activations into the MXU, f32 accumulation)."""
    w1, b1, w2o, w2a, b2, w3_row, b3 = prep
    xb = x.astype(jnp.bfloat16)
    ab = a.astype(jnp.bfloat16)
    obs = jnp.maximum(
        jnp.dot(xb, w1, preferred_element_type=jnp.float32) + b1, 0.0)
    h = jnp.maximum(
        jnp.dot(obs.astype(jnp.bfloat16), w2o, preferred_element_type=jnp.float32)
        + jnp.dot(ab, w2a, preferred_element_type=jnp.float32) + b2, 0.0)
    return jnp.sum(h * w3_row, axis=-1, keepdims=True) + b3


if __name__ == "__main__":
    B, OBS, ACT = 8, 28, 8  # mujoco-ant-ish sizes, small batch
    key = jax.random.PRNGKey(0)
    kx, ka, kp = jax.random.split(key, 3)
    x = jax.random.normal(kx, (B, OBS), jnp.float32)
    a = jax.random.normal(ka, (B, ACT), jnp.float32)

    torch_params = init_torch_style_params(kp, OBS, ACT)
    prep = prepare_params(torch_params)

    q = ddpg_critic(x, a, prep)
    q = jax.block_until_ready(q)
    assert q.shape == (B, 1)

    # Tight check vs a reference with identical bf16 rounding.
    q_ref_bf16 = reference_bf16(x, a, prep)
    assert jnp.allclose(q, q_ref_bf16, atol=1e-3, rtol=1e-3), "mismatch vs bf16 reference"

    # Loose check vs the exact f32 PyTorch-module semantics (bf16 weight /
    # activation rounding is an intentional policy).
    q_ref_f32 = reference_f32(x, a, torch_params)
    assert jnp.allclose(q, q_ref_f32, atol=5e-2, rtol=5e-2), "mismatch vs f32 reference"

    print("KERNEL_OK")
</pallas_src>

<mosaic_0001>
module attributes {stable_mosaic.version = 11 : i64} {
  func.func @ddpg_critic_kernel(%arg0: i32, %arg1: memref<8x28xf32, #tpu.memory_space<vmem>>, %arg2: memref<8x8xf32, #tpu.memory_space<vmem>>, %arg3: memref<28x512xbf16, #tpu.memory_space<vmem>>, %arg4: memref<1x512xf32, #tpu.memory_space<vmem>>, %arg5: memref<512x384xbf16, #tpu.memory_space<vmem>>, %arg6: memref<8x384xbf16, #tpu.memory_space<vmem>>, %arg7: memref<1x384xf32, #tpu.memory_space<vmem>>, %arg8: memref<1x384xf32, #tpu.memory_space<vmem>>, %arg9: memref<1xf32, #tpu.memory_space<smem>>, %arg10: memref<8x1xf32, #tpu.memory_space<vmem>>) attributes {dimension_semantics = [#tpu.dimension_semantics<parallel>], iteration_bounds = array<i64: 1>, scalar_prefetch = 0 : i64, scratch_operands = 0 : i64, tpu.core_type = #tpu.core_type<tc>, window_params = [{transform_indices = @transform_0, window_bounds = array<i64: 8, 28>}, {transform_indices = @transform_1, window_bounds = array<i64: 8, 8>}, {pipeline_mode = #tpu.pipeline_mode<synchronous>, transform_indices = @transform_2, window_bounds = array<i64: 28, 512>}, {pipeline_mode = #tpu.pipeline_mode<synchronous>, transform_indices = @transform_3, window_bounds = array<i64: 1, 512>}, {pipeline_mode = #tpu.pipeline_mode<synchronous>, transform_indices = @transform_4, window_bounds = array<i64: 512, 384>}, {pipeline_mode = #tpu.pipeline_mode<synchronous>, transform_indices = @transform_5, window_bounds = array<i64: 8, 384>}, {pipeline_mode = #tpu.pipeline_mode<synchronous>, transform_indices = @transform_6, window_bounds = array<i64: 1, 384>}, {pipeline_mode = #tpu.pipeline_mode<synchronous>, transform_indices = @transform_7, window_bounds = array<i64: 1, 384>}, {transform_indices = @transform_8, window_bounds = array<i64: 1>}, {transform_indices = @transform_9, window_bounds = array<i64: 8, 1>}]} {
    %c0 = arith.constant 0 : index
    %c0_0 = arith.constant 0 : index
    %0 = vector.load %arg1[%c0, %c0_0] : memref<8x28xf32, #tpu.memory_space<vmem>>, vector<8x28xf32>
    %1 = arith.truncf %0 : vector<8x28xf32> to vector<8x28xbf16>
    %c0_1 = arith.constant 0 : index
    %c0_2 = arith.constant 0 : index
    %2 = vector.load %arg2[%c0_1, %c0_2] : memref<8x8xf32, #tpu.memory_space<vmem>>, vector<8x8xf32>
    %3 = arith.truncf %2 : vector<8x8xf32> to vector<8x8xbf16>
    %c0_3 = arith.constant 0 : index
    %c0_4 = arith.constant 0 : index
    %4 = vector.load %arg3[%c0_3, %c0_4] : memref<28x512xbf16, #tpu.memory_space<vmem>>, vector<28x512xbf16>
    %cst = arith.constant dense<0.000000e+00> : vector<8x512xf32>
    %5 = tpu.matmul %1, %4, %cst {dimension_numbers = #tpu.dot_dimension_numbers<[1], [0], [0], [1], [0, 0, 1, 1], [], []>} : vector<8x28xbf16>, vector<28x512xbf16>, vector<8x512xf32> -> vector<8x512xf32>
    %c0_5 = arith.constant 0 : index
    %c0_6 = arith.constant 0 : index
    %6 = vector.load %arg4[%c0_5, %c0_6] : memref<1x512xf32, #tpu.memory_space<vmem>>, vector<1x512xf32>
    %7 = vector.broadcast %6 : vector<1x512xf32> to vector<8x512xf32>
    %8 = arith.addf %5, %7 : vector<8x512xf32>
    %cst_7 = arith.constant 0.000000e+00 : f32
    %9 = vector.broadcast %cst_7 : f32 to vector<8x512xf32>
    %10 = arith.maximumf %8, %9 : vector<8x512xf32>
    %11 = arith.truncf %10 : vector<8x512xf32> to vector<8x512xbf16>
    %c0_8 = arith.constant 0 : index
    %c0_9 = arith.constant 0 : index
    %12 = vector.load %arg5[%c0_8, %c0_9] : memref<512x384xbf16, #tpu.memory_space<vmem>>, vector<512x384xbf16>
    %cst_10 = arith.constant dense<0.000000e+00> : vector<8x384xf32>
    %13 = tpu.matmul %11, %12, %cst_10 {dimension_numbers = #tpu.dot_dimension_numbers<[1], [0], [0], [1], [0, 0, 1, 1], [], []>} : vector<8x512xbf16>, vector<512x384xbf16>, vector<8x384xf32> -> vector<8x384xf32>
    %c0_11 = arith.constant 0 : index
    %c0_12 = arith.constant 0 : index
    %14 = vector.load %arg6[%c0_11, %c0_12] : memref<8x384xbf16, #tpu.memory_space<vmem>>, vector<8x384xbf16>
    %cst_13 = arith.constant dense<0.000000e+00> : vector<8x384xf32>
    %15 = tpu.matmul %3, %14, %cst_13 {dimension_numbers = #tpu.dot_dimension_numbers<[1], [0], [0], [1], [0, 0, 1, 1], [], []>} : vector<8x8xbf16>, vector<8x384xbf16>, vector<8x384xf32> -> vector<8x384xf32>
    %16 = arith.addf %13, %15 : vector<8x384xf32>
    %c0_14 = arith.constant 0 : index
    %c0_15 = arith.constant 0 : index
    %17 = vector.load %arg7[%c0_14, %c0_15] : memref<1x384xf32, #tpu.memory_space<vmem>>, vector<1x384xf32>
    %18 = vector.broadcast %17 : vector<1x384xf32> to vector<8x384xf32>
    %19 = arith.addf %16, %18 : vector<8x384xf32>
    %cst_16 = arith.constant 0.000000e+00 : f32
    %20 = vector.broadcast %cst_16 : f32 to vector<8x384xf32>
    %21 = arith.maximumf %19, %20 : vector<8x384xf32>
    %c0_17 = arith.constant 0 : index
    %c0_18 = arith.constant 0 : index
    %22 = vector.load %arg8[%c0_17, %c0_18] : memref<1x384xf32, #tpu.memory_space<vmem>>, vector<1x384xf32>
    %23 = vector.broadcast %22 : vector<1x384xf32> to vector<8x384xf32>
    %24 = arith.mulf %21, %23 : vector<8x384xf32>
    %cst_19 = arith.constant dense<0.000000e+00> : vector<8xf32>
    %25 = vector.multi_reduction <add>, %24, %cst_19 [1] : vector<8x384xf32> to vector<8xf32>
    %26 = vector.shape_cast %25 : vector<8xf32> to vector<8x1xf32>
    %c0_20 = arith.constant 0 : index
    %27 = memref.load %arg9[%c0_20] : memref<1xf32, #tpu.memory_space<smem>>
    %28 = vector.broadcast %27 : f32 to vector<8x1xf32>
    %29 = arith.addf %26, %28 : vector<8x1xf32>
    %c0_21 = arith.constant 0 : index
    %c0_22 = arith.constant 0 : index
    %30 = vector.load %arg10[%c0_21, %c0_22] : memref<8x1xf32, #tpu.memory_space<vmem>>, vector<8x1xf32>
    tpu.vector_store %arg10[%c0_21, %c0_22], %29 {strides = array<i32>} : memref<8x1xf32, #tpu.memory_space<vmem>>, vector<8x1xf32>,
    return
  }
  func.func @transform_0(%arg0: i32) -> (i32, i32) {
    %c0_i32 = arith.constant 0 : i32
    %c0_i32_0 = arith.constant 0 : i32
    return %arg0, %c0_i32 : i32, i32
  }
  func.func @transform_1(%arg0: i32) -> (i32, i32) {
    %c0_i32 = arith.constant 0 : i32
    %c0_i32_0 = arith.constant 0 : i32
    return %arg0, %c0_i32 : i32, i32
  }
  func.func @transform_2(%arg0: i32) -> (i32, i32) {
    %c0_i32 = arith.constant 0 : i32
    %c0_i32_0 = arith.constant 0 : i32
    %c0_i32_1 = arith.constant 0 : i32
    return %c0_i32, %c0_i32_0 : i32, i32
  }
  func.func @transform_3(%arg0: i32) -> (i32, i32) {
    %c0_i32 = arith.constant 0 : i32
    %c0_i32_0 = arith.constant 0 : i32
    %c0_i32_1 = arith.constant 0 : i32
    return %c0_i32, %c0_i32_0 : i32, i32
  }
  func.func @transform_4(%arg0: i32) -> (i32, i32) {
    %c0_i32 = arith.constant 0 : i32
    %c0_i32_0 = arith.constant 0 : i32
    %c0_i32_1 = arith.constant 0 : i32
    return %c0_i32, %c0_i32_0 : i32, i32
  }
  func.func @transform_5(%arg0: i32) -> (i32, i32) {
    %c0_i32 = arith.constant 0 : i32
    %c0_i32_0 = arith.constant 0 : i32
    %c0_i32_1 = arith.constant 0 : i32
    return %c0_i32, %c0_i32_0 : i32, i32
  }
  func.func @transform_6(%arg0: i32) -> (i32, i32) {
    %c0_i32 = arith.constant 0 : i32
    %c0_i32_0 = arith.constant 0 : i32
    %c0_i32_1 = arith.constant 0 : i32
    return %c0_i32, %c0_i32_0 : i32, i32
  }
  func.func @transform_7(%arg0: i32) -> (i32, i32) {
    %c0_i32 = arith.constant 0 : i32
    %c0_i32_0 = arith.constant 0 : i32
    %c0_i32_1 = arith.constant 0 : i32
    return %c0_i32, %c0_i32_0 : i32, i32
  }
  func.func @transform_8(%arg0: i32) -> i32 {
    %c0_i32 = arith.constant 0 : i32
    %c0_i32_0 = arith.constant 0 : i32
    return %c0_i32 : i32
  }
  func.func @transform_9(%arg0: i32) -> (i32, i32) {
    %c0_i32 = arith.constant 0 : i32
    %c0_i32_0 = arith.constant 0 : i32
    return %arg0, %c0_i32 : i32, i32
  }
}

</mosaic_0001>

<llo_original>
// kernel: ddpg_critic.1
$region0: #{ddpg_critic.1}
  #allocation0 [shape = 'u32[]', space=smem, size = 0x4, offset = 0x4, fixed_abs, tag = 'smem constant byte address 0x4 - core index']
  #allocation1 [shape = 'u32[144,128]{1,0:T(1,128)}', space=vmem, size = 0x12000, scoped, tag = 'internal scratch']
  #allocation2 [shape = 'f32[1]{0:T(128)S(6)}', space=smem, size = 0x200, scoped, tag = 'scoped memory for ddpg_critic.1']
  %s0 = inlined_call_operand.hbm [shape: f32[8,28], index: 0, kind: input, shape index: {}]
  %s1 = inlined_call_operand.hbm [shape: f32[8,8], index: 1, kind: input, shape index: {}]
  %s2 = inlined_call_operand.hbm [shape: bf16[28,512], index: 2, kind: input, shape index: {}]
  %s3 = inlined_call_operand.vmem [shape: f32[1,512], index: 3, kind: input, shape index: {}]
  %s4 = inlined_call_operand.hbm [shape: bf16[512,384], index: 4, kind: input, shape index: {}]
  %s5 = inlined_call_operand.vmem [shape: bf16[8,384], index: 5, kind: input, shape index: {}]
  %s6 = inlined_call_operand.vmem [shape: f32[1,384], index: 6, kind: input, shape index: {}]
  %s7 = inlined_call_operand.vmem [shape: f32[1,384], index: 7, kind: input, shape index: {}]
  %s8 = inlined_call_operand.<no memory space> [shape: f32[1], index: 8, kind: input, shape index: {}]
  %s9 = inlined_call_operand.vmem [shape: f32[8,1], index: 9, kind: output, shape index: {}]
  %s10 = sld [smem:[#allocation0]]
  $region62: #{ddpg_critic.1} parent=0
    _
  %s12 = ssub.s32 1, %s10
  %s13 = scalar_select 0, %s12, %s10
  %14 = sst [smem:[#allocation2]] %s8
  $region1: #{ddpg_critic.1} parent=0
    #allocation3 [shape = 'u8[4096]{0}', space=vmem, size = 0x1000, scoped, tag = 'input window, operand 0, single buffered']
    #allocation4 [shape = 's32[1]{0}', space=sflag, size = 0x4, scoped, tag = 'scoped memory for ddpg_critic.1']
    #allocation5 [shape = 'u8[4096]{0}', space=vmem, size = 0x1000, scoped, tag = 'input window, operand 1, single buffered']
    #allocation6 [shape = 's32[1]{0}', space=sflag, size = 0x4, scoped, tag = 'scoped memory for ddpg_critic.1']
    #allocation7 [shape = 'u8[32768]{0}', space=vmem, size = 0x8000, scoped, tag = 'input window, operand 2, single buffered']
    #allocation8 [shape = 'u8[393216]{0}', space=vmem, size = 0x60000, scoped, tag = 'input window, operand 4, single buffered']
    #allocation9 [shape = 's32[1]{0}', space=sflag, size = 0x4, scoped, tag = 'scoped memory for ddpg_critic.1']
    %15 = vsyncpa [#allocation4], 0
    %16 = vsyncpa [#allocation6], 0
    %17 = vsyncpa [#allocation9], 0
    // Predicated region
    $region2: #{ddpg_critic.1} parent=1 // pred_check
      _
    $region3: #{ddpg_critic.1} parent=1 // pred_check_branch
      %19 = sbr.rel (0) target = $region5
    $region4: #{ddpg_critic.1} parent=1 // pred_region
      %s21 = ssub.s32 128, 128
      %22 = vsyncadd [#allocation4], %s21
      %s24 = sshll.u32 [#allocation3], 4
      %s25 = int_to_ptr.vmem [resolvable:$true] %s24
      %27 = dma.hbm_to_vmem [thread:$0]  %s0, 128, %s25, [#allocation4]
    $region5: #{ddpg_critic.1} parent=1 // pred_fallthru
      _
    // Predicated region
    $region6: #{ddpg_critic.1} parent=1 // pred_check
      _
    $region7: #{ddpg_critic.1} parent=1 // pred_check_branch
      %29 = sbr.rel (0) target = $region9
    $region8: #{ddpg_critic.1} parent=1 // pred_region
      %s31 = ssub.s32 128, 128
      %32 = vsyncadd [#allocation6], %s31
      %s34 = sshll.u32 [#allocation5], 4
      %s35 = int_to_ptr.vmem [resolvable:$true] %s34
      %37 = dma.hbm_to_vmem [thread:$0]  %s1, 128, %s35, [#allocation6]
    $region9: #{ddpg_critic.1} parent=1 // pred_fallthru
      _
    // Predicated region
    $region10: #{ddpg_critic.1} parent=1 // pred_check
      _
    $region11: #{ddpg_critic.1} parent=1 // pred_check_branch
      %39 = sbr.rel (0) target = $region13
    $region12: #{ddpg_critic.1} parent=1 // pred_region
      %s41 = ssub.s32 1024, 1024
      %42 = vsyncadd [#allocation6], %s41
      %s43 = sshll.u32 [#allocation7], 4
      %s44 = int_to_ptr.vmem [resolvable:$true] %s43
      %49 = dma.hbm_to_vmem [thread:$0]  %s2, 1024, %s44, [#allocation6], 256, 256, 16
    $region13: #{ddpg_critic.1} parent=1 // pred_fallthru
      _
    // Predicated region
    $region14: #{ddpg_critic.1} parent=1 // pred_check
      _
    $region15: #{ddpg_critic.1} parent=1 // pred_check_branch
      %51 = sbr.rel (0) target = $region17
    $region16: #{ddpg_critic.1} parent=1 // pred_region
      _
    $region17: #{ddpg_critic.1} parent=1 // pred_fallthru
      _
    // Predicated region
    $region18: #{ddpg_critic.1} parent=1 // pred_check
      _
    $region19: #{ddpg_critic.1} parent=1 // pred_check_branch
      %53 = sbr.rel (0) target = $region21
    $region20: #{ddpg_critic.1} parent=1 // pred_region
      %s55 = ssub.s32 12288, 12288
      %56 = vsyncadd [#allocation9], %s55
      %s57 = sshll.u32 [#allocation8], 4
      %s58 = int_to_ptr.vmem [resolvable:$true] %s57
      %63 = dma.hbm_to_vmem [thread:$0]  %s4, 12288, %s58, [#allocation9], 192, 192, 12
    $region21: #{ddpg_critic.1} parent=1 // pred_fallthru
      _
    // Predicated region
    $region22: #{ddpg_critic.1} parent=1 // pred_check
      _
    $region23: #{ddpg_critic.1} parent=1 // pred_check_branch
      %65 = sbr.rel (0) target = $region25
    $region24: #{ddpg_critic.1} parent=1 // pred_region
      _
    $region25: #{ddpg_critic.1} parent=1 // pred_fallthru
      _
    // Predicated region
    $region26: #{ddpg_critic.1} parent=1 // pred_check
      _
    $region27: #{ddpg_critic.1} parent=1 // pred_check_branch
      %67 = sbr.rel (0) target = $region29
    $region28: #{ddpg_critic.1} parent=1 // pred_region
      _
    $region29: #{ddpg_critic.1} parent=1 // pred_fallthru
      _
    // Predicated region
    $region30: #{ddpg_critic.1} parent=1 // pred_check
      _
    $region31: #{ddpg_critic.1} parent=1 // pred_check_branch
      %69 = sbr.rel (0) target = $region33
    $region32: #{ddpg_critic.1} parent=1 // pred_region
      _
    $region33: #{ddpg_critic.1} parent=1 // pred_fallthru
      _
    // Predicated region
    $region34: #{ddpg_critic.1} parent=1 // pred_check
      _
    $region35: #{ddpg_critic.1} parent=1 // pred_check_branch
      %71 = sbr.rel (0) target = $region37
    $region36: #{ddpg_critic.1} parent=1 // pred_region
      _
    $region37: #{ddpg_critic.1} parent=1 // pred_fallthru
      _
    // Predicated region
    $region38: #{ddpg_critic.1} parent=1 // pred_check
      _
    $region39: #{ddpg_critic.1} parent=1 // pred_check_branch
      %73 = sbr.rel (0) target = $region41
    $region40: #{ddpg_critic.1} parent=1 // pred_region
      %74 = dma.done [#allocation4], 128
    $region41: #{ddpg_critic.1} parent=1 // pred_fallthru
      _
    // Predicated region
    $region42: #{ddpg_critic.1} parent=1 // pred_check
      _
    $region43: #{ddpg_critic.1} parent=1 // pred_check_branch
      %76 = sbr.rel (0) target = $region45
    $region44: #{ddpg_critic.1} parent=1 // pred_region
      %77 = dma.done [#allocation6], 128
    $region45: #{ddpg_critic.1} parent=1 // pred_fallthru
      _
    // Predicated region
    $region46: #{ddpg_critic.1} parent=1 // pred_check
      _
    $region47: #{ddpg_critic.1} parent=1 // pred_check_branch
      %79 = sbr.rel (0) target = $region49
    $region48: #{ddpg_critic.1} parent=1 // pred_region
      %80 = dma.done [#allocation6], 1024
    $region49: #{ddpg_critic.1} parent=1 // pred_fallthru
      _
    // Predicated region
    $region50: #{ddpg_critic.1} parent=1 // pred_check
      _
    $region51: #{ddpg_critic.1} parent=1 // pred_check_branch
      %82 = sbr.rel (0) target = $region53
    $region52: #{ddpg_critic.1} parent=1 // pred_region
      %83 = dma.done [#allocation9], 12288
    $region53: #{ddpg_critic.1} parent=1 // pred_fallthru
      _
    %v85 = vld [vmem:[#allocation3] sm:$0xff]
    %v86 = vpack.c.bf16 %v85, %v85
    %v87 = vld [vmem:[#allocation5] sm:$0xff]
    %v88 = vpack.c.bf16 %v87, %v87
    %v89 = vld [vmem:[#allocation7] sm:$0xff]
    %v90 = vld [vmem:[#allocation7 + $0x8] sm:$0xff]
    %v91 = vld [vmem:[#allocation7 + $0x10] sm:$0xff]
    %v92 = vld [vmem:[#allocation7 + $0x18] sm:$0xff]
    %v93 = vld [vmem:[#allocation7 + $0x20] sm:$0xff]
    %v94 = vld [vmem:[#allocation7 + $0x28] sm:$0xff]
    %v95 = vld [vmem:[#allocation7 + $0x30] sm:$0x33]
    %v96 = vld [vmem:[#allocation7 + $0x38] sm:$0x33]
    %v97 = vld [vmem:[%s3] sm:$0xf]
    %v99 = vlaneseq
    %v100 = vshrl.u32 %v99, 7
    %v101 = vsub.s32 0, %v100
    %v102 = vrot.slane %v97, %v101
    %v103 = vlaneseq
    %v104 = vshrl.u32 %v103, 7
    %v105 = vsub.s32 1, %v104
    %v106 = vrot.slane %v97, %v105
    %v107 = vlaneseq
    %v108 = vshrl.u32 %v107, 7
    %v109 = vsub.s32 2, %v108
    %v110 = vrot.slane %v97, %v109
    %v111 = vlaneseq
    %v112 = vshrl.u32 %v111, 7
    %v113 = vsub.s32 3, %v112
    %v114 = vrot.slane %v97, %v113
    %v127 = vunpack.c.l.b16 %v89
    %v128 = vunpack.c.h.b16 %v89
    %v129 = vunpack.c.l.b16 %v90
    %v130 = vunpack.c.h.b16 %v90
    %v131 = vunpack.c.l.b16 %v91
    %v132 = vunpack.c.h.b16 %v91
    %v133 = vunpack.c.l.b16 %v92
    %v134 = vunpack.c.h.b16 %v92
    %v135 = vunpack.c.l.b16 %v93
    %v136 = vunpack.c.h.b16 %v93
    %v137 = vunpack.c.l.b16 %v94
    %v138 = vunpack.c.h.b16 %v94
    %v139 = vunpack.c.l.b16 %v95
    %v140 = vunpack.c.h.b16 %v95
    %v141 = vunpack.c.l.b16 %v96
    %v142 = vunpack.c.h.b16 %v96
    %v143 = vpack.c.b16 %v131, %v127
    %v144 = vpack.c.b16 %v132, %v128
    %v145 = vpack.c.b16 %v133, %v129
    %v146 = vpack.c.b16 %v134, %v130
    %v147 = vpack.c.b16 %v139, %v135
    %v148 = vpack.c.b16 %v140, %v136
    %v149 = vpack.c.b16 %v141, %v137
    %v150 = vpack.c.b16 %v142, %v138
    %vm155 = vcmask 228352
    %v157 = vsel %vm155, %v86, 0
    %vm159 = vcmask 1045504
    %v161 = vsel %vm159, %v147, 0
    %v164 = vsel %vm159, %v148, 0
    %v167 = vsel %vm159, %v149, 0
    %v170 = vsel %vm159, %v150, 0
    %172 = vmatprep.subr.bf16.mxu0 %v144
    %173 = vmatpush1.bf16.msra.mxu0 %v143
    %174 = vmatprep.subr.bf16.mxu0 %v164
    %175 = vmatpush1.bf16.msra.mxu0 %v161
    %176 = vmatprep.subr.bf16.mxu0 0
    %177 = vmatpush1.bf16.msra.mxu0 0
    %178 = vmatprep.subr.bf16.mxu0 0
    %179 = vmatpush1.bf16.msra.mxu0 0
    %180 = vmatprep.subr.bf16.mxu0 0
    %181 = vmatpush1.bf16.msra.mxu0 0
    %182 = vmatprep.subr.bf16.mxu0 0
    %183 = vmatpush1.bf16.msra.mxu0 0
    %184 = vmatprep.subr.bf16.mxu0 0
    %185 = vmatpush1.bf16.msra.mxu0 0
    %186 = vmatprep.subr.bf16.mxu0 0
    %187 = vmatpush1.bf16.msra.mxu0 0
    %188 = vmatprep.subr.bf16.mxu0 0
    %189 = vmatpush1.bf16.msra.mxu0 0
    %190 = vmatprep.subr.bf16.mxu0 0
    %191 = vmatpush1.bf16.msra.mxu0 0
    %192 = vmatprep.subr.bf16.mxu0 0
    %193 = vmatpush1.bf16.msra.mxu0 0
    %194 = vmatprep.subr.bf16.mxu0 0
    %195 = vmatpush1.bf16.msra.mxu0 0
    %196 = vmatprep.subr.bf16.mxu0 0
    %197 = vmatpush1.bf16.msra.mxu0 0
    %198 = vmatprep.subr.bf16.mxu0 0
    %199 = vmatpush1.bf16.msra.mxu0 0
    %200 = vmatprep.subr.bf16.mxu0 0
    %201 = vmatpush1.bf16.msra.mxu0 0
    %202 = vmatprep.subr.bf16.mxu0 0
    %203 = vmatpush1.bf16.msra.mxu0 0
    %204 = vmatprep.mubr.bf16.mxu0 0
    %205 = vmatmul.mubr.bf16.gmra.mrb[0].mxu0 %v157
    %v206 = vpop.f32.mrb[0].mxu0
    %v207 = vadd.f32 %v102, %v206
    %v208 = vpop.f32.mrb[0].mxu0
    %v209 = vadd.f32 %v106, %v208
    %v210 = vpop.f32.mrb[0].mxu0
    %v211 = vpop.f32.mrb[0].mxu0
    %212 = vdwg.mxu0
    %213 = vmatprep.subr.bf16.mxu0 %v146
    %214 = vmatpush1.bf16.msra.mxu0 %v145
    %215 = vmatprep.subr.bf16.mxu0 %v170
    %216 = vmatpush1.bf16.msra.mxu0 %v167
    %217 = vmatprep.subr.bf16.mxu0 0
    %218 = vmatpush1.bf16.msra.mxu0 0
    %219 = vmatprep.subr.bf16.mxu0 0
    %220 = vmatpush1.bf16.msra.mxu0 0
    %221 = vmatprep.subr.bf16.mxu0 0
    %222 = vmatpush1.bf16.msra.mxu0 0
    %223 = vmatprep.subr.bf16.mxu0 0
    %224 = vmatpush1.bf16.msra.mxu0 0
    %225 = vmatprep.subr.bf16.mxu0 0
    %226 = vmatpush1.bf16.msra.mxu0 0
    %227 = vmatprep.subr.bf16.mxu0 0
    %228 = vmatpush1.bf16.msra.mxu0 0
    %229 = vmatprep.subr.bf16.mxu0 0
    %230 = vmatpush1.bf16.msra.mxu0 0
    %231 = vmatprep.subr.bf16.mxu0 0
    %232 = vmatpush1.bf16.msra.mxu0 0
    %233 = vmatprep.subr.bf16.mxu0 0
    %234 = vmatpush1.bf16.msra.mxu0 0
    %235 = vmatprep.subr.bf16.mxu0 0
    %236 = vmatpush1.bf16.msra.mxu0 0
    %237 = vmatprep.subr.bf16.mxu0 0
    %238 = vmatpush1.bf16.msra.mxu0 0
    %239 = vmatprep.subr.bf16.mxu0 0
    %240 = vmatpush1.bf16.msra.mxu0 0
    %241 = vmatprep.subr.bf16.mxu0 0
    %242 = vmatpush1.bf16.msra.mxu0 0
    %243 = vmatprep.subr.bf16.mxu0 0
    %244 = vmatpush1.bf16.msra.mxu0 0
    %245 = vmatprep.mubr.bf16.mxu0 0
    %246 = vmatmul.mubr.bf16.gmra.mrb[0].mxu0 %v157
    %v247 = vpop.f32.mrb[0].mxu0
    %v248 = vadd.f32 %v110, %v247
    %v249 = vpop.f32.mrb[0].mxu0
    %v250 = vadd.f32 %v114, %v249
    %v251 = vpop.f32.mrb[0].mxu0
    %v252 = vpop.f32.mrb[0].mxu0
    %253 = vdwg.mxu0
    %v254 = vmax.f32 %v207, 0.0
    %v255 = vmax.f32 %v209, 0.0
    %v256 = vmax.f32 %v248, 0.0
    %v257 = vmax.f32 %v250, 0.0
    %v258 = vpack.c.bf16 %v254, %v254
    %v259 = vpack.c.bf16 %v255, %v255
    %v260 = vpack.c.bf16 %v256, %v256
    %v261 = vpack.c.bf16 %v257, %v257
    %v262 = vld [vmem:[#allocation8] sm:$0xff]
    %v263 = vld [vmem:[#allocation8 + $0x8] sm:$0xf]
    %v264 = vld [vmem:[#allocation8 + $0xc] sm:$0xff]
    %v265 = vld [vmem:[#allocation8 + $0x14] sm:$0xf]
    %v266 = vld [vmem:[#allocation8 + $0x18] sm:$0xff]
    %v267 = vld [vmem:[#allocation8 + $0x20] sm:$0xf]
    %v268 = vld [vmem:[#allocation8 + $0x24] sm:$0xff]
    %v269 = vld [vmem:[#allocation8 + $0x2c] sm:$0xf]
    %v270 = vld [vmem:[#allocation8 + $0x30] sm:$0xff]
    %v271 = vld [vmem:[#allocation8 + $0x38] sm:$0xf]
    %v272 = vld [vmem:[#allocation8 + $0x3c] sm:$0xff]
    %v273 = vld [vmem:[#allocation8 + $0x44] sm:$0xf]
    %v274 = vld [vmem:[#allocation8 + $0x48] sm:$0xff]
    %v275 = vld [vmem:[#allocation8 + $0x50] sm:$0xf]
    %v276 = vld [vmem:[#allocation8 + $0x54] sm:$0xff]
    %v277 = vld [vmem:[#allocation8 + $0x5c] sm:$0xf]
    %v278 = vld [vmem:[#allocation8 + $0x60] sm:$0xff]
    %v279 = vld [vmem:[#allocation8 + $0x68] sm:$0xf]
    %v280 = vld [vmem:[#allocation8 + $0x6c] sm:$0xff]
    %v281 = vld [vmem:[#allocation8 + $0x74] sm:$0xf]
    %v282 = vld [vmem:[#allocation8 + $0x78] sm:$0xff]
    %v283 = vld [vmem:[#allocation8 + $0x80] sm:$0xf]
    %v284 = vld [vmem:[#allocation8 + $0x84] sm:$0xff]
    %v285 = vld [vmem:[#allocation8 + $0x8c] sm:$0xf]
    %v286 = vld [vmem:[#allocation8 + $0x90] sm:$0xff]
    %v287 = vld [vmem:[#allocation8 + $0x98] sm:$0xf]
    %v288 = vld [vmem:[#allocation8 + $0x9c] sm:$0xff]
    %v289 = vld [vmem:[#allocation8 + $0xa4] sm:$0xf]
    %v290 = vld [vmem:[#allocation8 + $0xa8] sm:$0xff]
    %v291 = vld [vmem:[#allocation8 + $0xb0] sm:$0xf]
    %v292 = vld [vmem:[#allocation8 + $0xb4] sm:$0xff]
    %v293 = vld [vmem:[#allocation8 + $0xbc] sm:$0xf]
    %v294 = vld [vmem:[#allocation8 + $0xc0] sm:$0xff]
    %v295 = vld [vmem:[#allocation8 + $0xc8] sm:$0xf]
    %v296 = vld [vmem:[#allocation8 + $0xcc] sm:$0xff]
    %v297 = vld [vmem:[#allocation8 + $0xd4] sm:$0xf]
    %v298 = vld [vmem:[#allocation8 + $0xd8] sm:$0xff]
    %v299 = vld [vmem:[#allocation8 + $0xe0] sm:$0xf]
    %v300 = vld [vmem:[#allocation8 + $0xe4] sm:$0xff]
    %v301 = vld [vmem:[#allocation8 + $0xec] sm:$0xf]
    %v302 = vld [vmem:[#allocation8 + $0xf0] sm:$0xff]
    %v303 = vld [vmem:[#allocation8 + $0xf8] sm:$0xf]
    %v304 = vld [vmem:[#allocation8 + $0xfc] sm:$0xff]
    %v305 = vld [vmem:[#allocation8 + $0x104] sm:$0xf]
    %v306 = vld [vmem:[#allocation8 + $0x108] sm:$0xff]
    %v307 = vld [vmem:[#allocation8 + $0x110] sm:$0xf]
    %v308 = vld [vmem:[#allocation8 + $0x114] sm:$0xff]
    %v309 = vld [vmem:[#allocation8 + $0x11c] sm:$0xf]
    %v310 = vld [vmem:[#allocation8 + $0x120] sm:$0xff]
    %v311 = vld [vmem:[#allocation8 + $0x128] sm:$0xf]
    %v312 = vld [vmem:[#allocation8 + $0x12c] sm:$0xff]
    %v313 = vld [vmem:[#allocation8 + $0x134] sm:$0xf]
    %v314 = vld [vmem:[#allocation8 + $0x138] sm:$0xff]
    %v315 = vld [vmem:[#allocation8 + $0x140] sm:$0xf]
    %v316 = vld [vmem:[#allocation8 + $0x144] sm:$0xff]
    %v317 = vld [vmem:[#allocation8 + $0x14c] sm:$0xf]
    %v318 = vld [vmem:[#allocation8 + $0x150] sm:$0xff]
    %v319 = vld [vmem:[#allocation8 + $0x158] sm:$0xf]
    %v320 = vld [vmem:[#allocation8 + $0x15c] sm:$0xff]
    %v321 = vld [vmem:[#allocation8 + $0x164] sm:$0xf]
    %v322 = vld [vmem:[#allocation8 + $0x168] sm:$0xff]
    %v323 = vld [vmem:[#allocation8 + $0x170] sm:$0xf]
    %v324 = vld [vmem:[#allocation8 + $0x174] sm:$0xff]
    %v325 = vld [vmem:[#allocation8 + $0x17c] sm:$0xf]
    %v326 = vld [vmem:[#allocation8 + $0x180] sm:$0xff]
    %v327 = vld [vmem:[#allocation8 + $0x188] sm:$0xf]
    %v328 = vld [vmem:[#allocation8 + $0x18c] sm:$0xff]
    %v329 = vld [vmem:[#allocation8 + $0x194] sm:$0xf]
    %v330 = vld [vmem:[#allocation8 + $0x198] sm:$0xff]
    %v331 = vld [vmem:[#allocation8 + $0x1a0] sm:$0xf]
    %v332 = vld [vmem:[#allocation8 + $0x1a4] sm:$0xff]
    %v333 = vld [vmem:[#allocation8 + $0x1ac] sm:$0xf]
    %v334 = vld [vmem:[#allocation8 + $0x1b0] sm:$0xff]
    %v335 = vld [vmem:[#allocation8 + $0x1b8] sm:$0xf]
    %v336 = vld [vmem:[#allocation8 + $0x1bc] sm:$0xff]
    %v337 = vld [vmem:[#allocation8 + $0x1c4] sm:$0xf]
    %v338 = vld [vmem:[#allocation8 + $0x1c8] sm:$0xff]
    %v339 = vld [vmem:[#allocation8 + $0x1d0] sm:$0xf]
    %v340 = vld [vmem:[#allocation8 + $0x1d4] sm:$0xff]
    %v341 = vld [vmem:[#allocation8 + $0x1dc] sm:$0xf]
    %v342 = vld [vmem:[#allocation8 + $0x1e0] sm:$0xff]
    %v343 = vld [vmem:[#allocation8 + $0x1e8] sm:$0xf]
    %v344 = vld [vmem:[#allocation8 + $0x1ec] sm:$0xff]
    %v345 = vld [vmem:[#allocation8 + $0x1f4] sm:$0xf]
    %v346 = vld [vmem:[#allocation8 + $0x1f8] sm:$0xff]
    %v347 = vld [vmem:[#allocation8 + $0x200] sm:$0xf]
    %v348 = vld [vmem:[#allocation8 + $0x204] sm:$0xff]
    %v349 = vld [vmem:[#allocation8 + $0x20c] sm:$0xf]
    %v350 = vld [vmem:[#allocation8 + $0x210] sm:$0xff]
    %v351 = vld [vmem:[#allocation8 + $0x218] sm:$0xf]
    %v352 = vld [vmem:[#allocation8 + $0x21c] sm:$0xff]
    %v353 = vld [vmem:[#allocation8 + $0x224] sm:$0xf]
    %v354 = vld [vmem:[#allocation8 + $0x228] sm:$0xff]
    %v355 = vld [vmem:[#allocation8 + $0x230] sm:$0xf]
    %v356 = vld [vmem:[#allocation8 + $0x234] sm:$0xff]
    %v357 = vld [vmem:[#allocation8 + $0x23c] sm:$0xf]
    %v358 = vld [vmem:[#allocation8 + $0x240] sm:$0xff]
    %v359 = vld [vmem:[#allocation8 + $0x248] sm:$0xf]
    %v360 = vld [vmem:[#allocation8 + $0x24c] sm:$0xff]
    %v361 = vld [vmem:[#allocation8 + $0x254] sm:$0xf]
    %v362 = vld [vmem:[#allocation8 + $0x258] sm:$0xff]
    %v363 = vld [vmem:[#allocation8 + $0x260] sm:$0xf]
    %v364 = vld [vmem:[#allocation8 + $0x264] sm:$0xff]
    %v365 = vld [vmem:[#allocation8 + $0x26c] sm:$0xf]
    %v366 = vld [vmem:[#allocation8 + $0x270] sm:$0xff]
    %v367 = vld [vmem:[#allocation8 + $0x278] sm:$0xf]
    %v368 = vld [vmem:[#allocation8 + $0x27c] sm:$0xff]
    %v369 = vld [vmem:[#allocation8 + $0x284] sm:$0xf]
    %v370 = vld [vmem:[#allocation8 + $0x288] sm:$0xff]
    %v371 = vld [vmem:[#allocation8 + $0x290] sm:$0xf]
    %v372 = vld [vmem:[#allocation8 + $0x294] sm:$0xff]
    %v373 = vld [vmem:[#allocation8 + $0x29c] sm:$0xf]
    %v374 = vld [vmem:[#allocation8 + $0x2a0] sm:$0xff]
    %v375 = vld [vmem:[#allocation8 + $0x2a8] sm:$0xf]
    %v376 = vld [vmem:[#allocation8 + $0x2ac] sm:$0xff]
    %v377 = vld [vmem:[#allocation8 + $0x2b4] sm:$0xf]
    %v378 = vld [vmem:[#allocation8 + $0x2b8] sm:$0xff]
    %v379 = vld [vmem:[#allocation8 + $0x2c0] sm:$0xf]
    %v380 = vld [vmem:[#allocation8 + $0x2c4] sm:$0xff]
    %v381 = vld [vmem:[#allocation8 + $0x2cc] sm:$0xf]
    %v382 = vld [vmem:[#allocation8 + $0x2d0] sm:$0xff]
    %v383 = vld [vmem:[#allocation8 + $0x2d8] sm:$0xf]
    %v384 = vld [vmem:[#allocation8 + $0x2dc] sm:$0xff]
    %v385 = vld [vmem:[#allocation8 + $0x2e4] sm:$0xf]
    %v386 = vld [vmem:[#allocation8 + $0x2e8] sm:$0xff]
    %v387 = vld [vmem:[#allocation8 + $0x2f0] sm:$0xf]
    %v388 = vld [vmem:[#allocation8 + $0x2f4] sm:$0xff]
    %v389 = vld [vmem:[#allocation8 + $0x2fc] sm:$0xf]
    %v390 = vld [vmem:[%s5] sm:$0xff]
    %v391 = vld [vmem:[%s5 + $0x8] sm:$0xf]
    %v394 = vunpack.c.l.b16 %v390
    %v395 = vunpack.c.h.b16 %v390
    %v396 = vunpack.c.l.b16 %v391
    %v397 = vpack.c.b16 %v394, %v394
    %v398 = vpack.c.b16 %v395, %v395
    %v399 = vpack.c.b16 %v396, %v396
    %vm400 = vcmask 64512
    %v402 = vsel %vm400, %v88, 0
    %vm404 = vcmask 1043456
    %v406 = vsel %vm404, %v397, 0
    %v409 = vsel %vm404, %v398, 0
    %v412 = vsel %vm404, %v399, 0
    %414 = vmatprep.subr.bf16.mxu0 %v409
    %415 = vmatpush1.bf16.msra.mxu0 %v406
    %416 = vmatprep.subr.bf16.mxu0 0
    %417 = vmatpush1.bf16.msra.mxu0 0
    %418 = vmatprep.subr.bf16.mxu0 0
    %419 = vmatpush1.bf16.msra.mxu0 0
    %420 = vmatprep.subr.bf16.mxu0 0
    %421 = vmatpush1.bf16.msra.mxu0 0
    %422 = vmatprep.subr.bf16.mxu0 0
    %423 = vmatpush1.bf16.msra.mxu0 0
    %424 = vmatprep.subr.bf16.mxu0 0
    %425 = vmatpush1.bf16.msra.mxu0 0
    %426 = vmatprep.subr.bf16.mxu0 0
    %427 = vmatpush1.bf16.msra.mxu0 0
    %428 = vmatprep.subr.bf16.mxu0 0
    %429 = vmatpush1.bf16.msra.mxu0 0
    %430 = vmatprep.subr.bf16.mxu0 0
    %431 = vmatpush1.bf16.msra.mxu0 0
    %432 = vmatprep.subr.bf16.mxu0 0
    %433 = vmatpush1.bf16.msra.mxu0 0
    %434 = vmatprep.subr.bf16.mxu0 0
    %435 = vmatpush1.bf16.msra.mxu0 0
    %436 = vmatprep.subr.bf16.mxu0 0
    %437 = vmatpush1.bf16.msra.mxu0 0
    %438 = vmatprep.subr.bf16.mxu0 0
    %439 = vmatpush1.bf16.msra.mxu0 0
    %440 = vmatprep.subr.bf16.mxu0 0
    %441 = vmatpush1.bf16.msra.mxu0 0
    %442 = vmatprep.subr.bf16.mxu0 0
    %443 = vmatpush1.bf16.msra.mxu0 0
    %444 = vmatprep.subr.bf16.mxu0 0
    %445 = vmatpush1.bf16.msra.mxu0 0
    %446 = vmatprep.mubr.bf16.mxu0 0
    %447 = vmatmul.mubr.bf16.gmra.mrb[0].mxu0 %v402
    %v448 = vpop.f32.mrb[0].mxu0
    %v449 = vadd.f32 0.0, %v448
    %v450 = vpop.f32.mrb[0].mxu0
    %v451 = vadd.f32 0.0, %v450
    %v452 = vpop.f32.mrb[0].mxu0
    %v453 = vpop.f32.mrb[0].mxu0
    %454 = vdwg.mxu0
    %455 = vmatprep.subr.bf16.mxu0 0
    %456 = vmatpush1.bf16.msra.mxu0 %v412
    %457 = vmatprep.subr.bf16.mxu0 0
    %458 = vmatpush1.bf16.msra.mxu0 0
    %459 = vmatprep.subr.bf16.mxu0 0
    %460 = vmatpush1.bf16.msra.mxu0 0
    %461 = vmatprep.subr.bf16.mxu0 0
    %462 = vmatpush1.bf16.msra.mxu0 0
    %463 = vmatprep.subr.bf16.mxu0 0
    %464 = vmatpush1.bf16.msra.mxu0 0
    %465 = vmatprep.subr.bf16.mxu0 0
    %466 = vmatpush1.bf16.msra.mxu0 0
    %467 = vmatprep.subr.bf16.mxu0 0
    %468 = vmatpush1.bf16.msra.mxu0 0
    %469 = vmatprep.subr.bf16.mxu0 0
    %470 = vmatpush1.bf16.msra.mxu0 0
    %471 = vmatprep.subr.bf16.mxu0 0
    %472 = vmatpush1.bf16.msra.mxu0 0
    %473 = vmatprep.subr.bf16.mxu0 0
    %474 = vmatpush1.bf16.msra.mxu0 0
    %475 = vmatprep.subr.bf16.mxu0 0
    %476 = vmatpush1.bf16.msra.mxu0 0
    %477 = vmatprep.subr.bf16.mxu0 0
    %478 = vmatpush1.bf16.msra.mxu0 0
    %479 = vmatprep.subr.bf16.mxu0 0
    %480 = vmatpush1.bf16.msra.mxu0 0
    %481 = vmatprep.subr.bf16.mxu0 0
    %482 = vmatpush1.bf16.msra.mxu0 0
    %483 = vmatprep.subr.bf16.mxu0 0
    %484 = vmatpush1.bf16.msra.mxu0 0
    %485 = vmatprep.subr.bf16.mxu0 0
    %486 = vmatpush1.bf16.msra.mxu0 0
    %487 = vmatprep.mubr.bf16.mxu0 0
    %488 = vmatmul.mubr.bf16.gmra.mrb[0].mxu0 %v402
    %v489 = vpop.f32.mrb[0].mxu0
    %v490 = vadd.f32 0.0, %v489
    %v491 = vpop.f32.mrb[0].mxu0
    %v492 = vpop.f32.mrb[0].mxu0
    %v493 = vpop.f32.mrb[0].mxu0
    %494 = vdwg.mxu0
    %v623 = vunpack.c.l.b16 %v262
    %v624 = vunpack.c.h.b16 %v262
    %v625 = vunpack.c.l.b16 %v263
    %v626 = vunpack.c.l.b16 %v264
    %v627 = vunpack.c.h.b16 %v264
    %v628 = vunpack.c.l.b16 %v265
    %v629 = vunpack.c.l.b16 %v266
    %v630 = vunpack.c.h.b16 %v266
    %v631 = vunpack.c.l.b16 %v267
    %v632 = vunpack.c.l.b16 %v268
    %v633 = vunpack.c.h.b16 %v268
    %v634 = vunpack.c.l.b16 %v269
    %v635 = vunpack.c.l.b16 %v270
    %v636 = vunpack.c.h.b16 %v270
    %v637 = vunpack.c.l.b16 %v271
    %v638 = vunpack.c.l.b16 %v272
    %v639 = vunpack.c.h.b16 %v272
    %v640 = vunpack.c.l.b16 %v273
    %v641 = vunpack.c.l.b16 %v274
    %v642 = vunpack.c.h.b16 %v274
    %v643 = vunpack.c.l.b16 %v275
    %v644 = vunpack.c.l.b16 %v276
    %v645 = vunpack.c.h.b16 %v276
    %v646 = vunpack.c.l.b16 %v277
    %v647 = vunpack.c.l.b16 %v278
    %v648 = vunpack.c.h.b16 %v278
    %v649 = vunpack.c.l.b16 %v279
    %v650 = vunpack.c.l.b16 %v280
    %v651 = vunpack.c.h.b16 %v280
    %v652 = vunpack.c.l.b16 %v281
    %v653 = vunpack.c.l.b16 %v282
    %v654 = vunpack.c.h.b16 %v282
    %v655 = vunpack.c.l.b16 %v283
    %v656 = vunpack.c.l.b16 %v284
    %v657 = vunpack.c.h.b16 %v284
    %v658 = vunpack.c.l.b16 %v285
    %v659 = vunpack.c.l.b16 %v286
    %v660 = vunpack.c.h.b16 %v286
    %v661 = vunpack.c.l.b16 %v287
    %v662 = vunpack.c.l.b16 %v288
    %v663 = vunpack.c.h.b16 %v288
    %v664 = vunpack.c.l.b16 %v289
    %v665 = vunpack.c.l.b16 %v290
    %v666 = vunpack.c.h.b16 %v290
    %v667 = vunpack.c.l.b16 %v291
    %v668 = vunpack.c.l.b16 %v292
    %v669 = vunpack.c.h.b16 %v292
    %v670 = vunpack.c.l.b16 %v293
    %v671 = vunpack.c.l.b16 %v294
    %v672 = vunpack.c.h.b16 %v294
    %v673 = vunpack.c.l.b16 %v295
    %v674 = vunpack.c.l.b16 %v296
    %v675 = vunpack.c.h.b16 %v296
    %v676 = vunpack.c.l.b16 %v297
    %v677 = vunpack.c.l.b16 %v298
    %v678 = vunpack.c.h.b16 %v298
    %v679 = vunpack.c.l.b16 %v299
    %v680 = vunpack.c.l.b16 %v300
    %v681 = vunpack.c.h.b16 %v300
    %v682 = vunpack.c.l.b16 %v301
    %v683 = vunpack.c.l.b16 %v302
    %v684 = vunpack.c.h.b16 %v302
    %v685 = vunpack.c.l.b16 %v303
    %v686 = vunpack.c.l.b16 %v304
    %v687 = vunpack.c.h.b16 %v304
    %v688 = vunpack.c.l.b16 %v305
    %v689 = vunpack.c.l.b16 %v306
    %v690 = vunpack.c.h.b16 %v306
    %v691 = vunpack.c.l.b16 %v307
    %v692 = vunpack.c.l.b16 %v308
    %v693 = vunpack.c.h.b16 %v308
    %v694 = vunpack.c.l.b16 %v309
    %v695 = vunpack.c.l.b16 %v310
    %v696 = vunpack.c.h.b16 %v310
    %v697 = vunpack.c.l.b16 %v311
    %v698 = vunpack.c.l.b16 %v312
    %v699 = vunpack.c.h.b16 %v312
    %v700 = vunpack.c.l.b16 %v313
    %v701 = vunpack.c.l.b16 %v314
    %v702 = vunpack.c.h.b16 %v314
    %v703 = vunpack.c.l.b16 %v315
    %v704 = vunpack.c.l.b16 %v316
    %v705 = vunpack.c.h.b16 %v316
    %v706 = vunpack.c.l.b16 %v317
    %v707 = vunpack.c.l.b16 %v318
    %v708 = vunpack.c.h.b16 %v318
    %v709 = vunpack.c.l.b16 %v319
    %v710 = vunpack.c.l.b16 %v320
    %v711 = vunpack.c.h.b16 %v320
    %v712 = vunpack.c.l.b16 %v321
    %v713 = vunpack.c.l.b16 %v322
    %v714 = vunpack.c.h.b16 %v322
    %v715 = vunpack.c.l.b16 %v323
    %v716 = vunpack.c.l.b16 %v324
    %v717 = vunpack.c.h.b16 %v324
    %v718 = vunpack.c.l.b16 %v325
    %v719 = vunpack.c.l.b16 %v326
    %v720 = vunpack.c.h.b16 %v326
    %v721 = vunpack.c.l.b16 %v327
    %v722 = vunpack.c.l.b16 %v328
    %v723 = vunpack.c.h.b16 %v328
    %v724 = vunpack.c.l.b16 %v329
    %v725 = vunpack.c.l.b16 %v330
    %v726 = vunpack.c.h.b16 %v330
    %v727 = vunpack.c.l.b16 %v331
    %v728 = vunpack.c.l.b16 %v332
    %v729 = vunpack.c.h.b16 %v332
    %v730 = vunpack.c.l.b16 %v333
    %v731 = vunpack.c.l.b16 %v334
    %v732 = vunpack.c.h.b16 %v334
    %v733 = vunpack.c.l.b16 %v335
    %v734 = vunpack.c.l.b16 %v336
    %v735 = vunpack.c.h.b16 %v336
    %v736 = vunpack.c.l.b16 %v337
    %v737 = vunpack.c.l.b16 %v338
    %v738 = vunpack.c.h.b16 %v338
    %v739 = vunpack.c.l.b16 %v339
    %v740 = vunpack.c.l.b16 %v340
    %v741 = vunpack.c.h.b16 %v340
    %v742 = vunpack.c.l.b16 %v341
    %v743 = vunpack.c.l.b16 %v342
    %v744 = vunpack.c.h.b16 %v342
    %v745 = vunpack.c.l.b16 %v343
    %v746 = vunpack.c.l.b16 %v344
    %v747 = vunpack.c.h.b16 %v344
    %v748 = vunpack.c.l.b16 %v345
    %v749 = vunpack.c.l.b16 %v346
    %v750 = vunpack.c.h.b16 %v346
    %v751 = vunpack.c.l.b16 %v347
    %v752 = vunpack.c.l.b16 %v348
    %v753 = vunpack.c.h.b16 %v348
    %v754 = vunpack.c.l.b16 %v349
    %v755 = vunpack.c.l.b16 %v350
    %v756 = vunpack.c.h.b16 %v350
    %v757 = vunpack.c.l.b16 %v351
    %v758 = vunpack.c.l.b16 %v352
    %v759 = vunpack.c.h.b16 %v352
    %v760 = vunpack.c.l.b16 %v353
    %v761 = vunpack.c.l.b16 %v354
    %v762 = vunpack.c.h.b16 %v354
    %v763 = vunpack.c.l.b16 %v355
    %v764 = vunpack.c.l.b16 %v356
    %v765 = vunpack.c.h.b16 %v356
    %v766 = vunpack.c.l.b16 %v357
    %v767 = vunpack.c.l.b16 %v358
    %v768 = vunpack.c.h.b16 %v358
    %v769 = vunpack.c.l.b16 %v359
    %v770 = vunpack.c.l.b16 %v360
    %v771 = vunpack.c.h.b16 %v360
    %v772 = vunpack.c.l.b16 %v361
    %v773 = vunpack.c.l.b16 %v362
    %v774 = vunpack.c.h.b16 %v362
    %v775 = vunpack.c.l.b16 %v363
    %v776 = vunpack.c.l.b16 %v364
    %v777 = vunpack.c.h.b16 %v364
    %v778 = vunpack.c.l.b16 %v365
    %v779 = vunpack.c.l.b16 %v366
    %v780 = vunpack.c.h.b16 %v366
    %v781 = vunpack.c.l.b16 %v367
    %v782 = vunpack.c.l.b16 %v368
    %v783 = vunpack.c.h.b16 %v368
    %v784 = vunpack.c.l.b16 %v369
    %v785 = vunpack.c.l.b16 %v370
    %v786 = vunpack.c.h.b16 %v370
    %v787 = vunpack.c.l.b16 %v371
    %v788 = vunpack.c.l.b16 %v372
    %v789 = vunpack.c.h.b16 %v372
    %v790 = vunpack.c.l.b16 %v373
    %v791 = vunpack.c.l.b16 %v374
    %v792 = vunpack.c.h.b16 %v374
    %v793 = vunpack.c.l.b16 %v375
    %v794 = vunpack.c.l.b16 %v376
    %v795 = vunpack.c.h.b16 %v376
    %v796 = vunpack.c.l.b16 %v377
    %v797 = vunpack.c.l.b16 %v378
    %v798 = vunpack.c.h.b16 %v378
    %v799 = vunpack.c.l.b16 %v379
    %v800 = vunpack.c.l.b16 %v380
    %v801 = vunpack.c.h.b16 %v380
    %v802 = vunpack.c.l.b16 %v381
    %v803 = vunpack.c.l.b16 %v382
    %v804 = vunpack.c.h.b16 %v382
    %v805 = vunpack.c.l.b16 %v383
    %v806 = vunpack.c.l.b16 %v384
    %v807 = vunpack.c.h.b16 %v384
    %v808 = vunpack.c.l.b16 %v385
    %v809 = vunpack.c.l.b16 %v386
    %v810 = vunpack.c.h.b16 %v386
    %v811 = vunpack.c.l.b16 %v387
    %v812 = vunpack.c.l.b16 %v388
    %v813 = vunpack.c.h.b16 %v388
    %v814 = vunpack.c.l.b16 %v389
    %v815 = vpack.c.b16 %v626, %v623
    %v816 = vpack.c.b16 %v627, %v624
    %v817 = vpack.c.b16 %v628, %v625
    %v818 = vpack.c.b16 %v632, %v629
    %v819 = vpack.c.b16 %v633, %v630
    %v820 = vpack.c.b16 %v634, %v631
    %v821 = vpack.c.b16 %v638, %v635
    %v822 = vpack.c.b16 %v639, %v636
    %v823 = vpack.c.b16 %v640, %v637
    %v824 = vpack.c.b16 %v644, %v641
    %v825 = vpack.c.b16 %v645, %v642
    %v826 = vpack.c.b16 %v646, %v643
    %v827 = vpack.c.b16 %v650, %v647
    %v828 = vpack.c.b16 %v651, %v648
    %v829 = vpack.c.b16 %v652, %v649
    %v830 = vpack.c.b16 %v656, %v653
    %v831 = vpack.c.b16 %v657, %v654
    %v832 = vpack.c.b16 %v658, %v655
    %v833 = vpack.c.b16 %v662, %v659
    %v834 = vpack.c.b16 %v663, %v660
    %v835 = vpack.c.b16 %v664, %v661
    %v836 = vpack.c.b16 %v668, %v665
    %v837 = vpack.c.b16 %v669, %v666
    %v838 = vpack.c.b16 %v670, %v667
    %v839 = vpack.c.b16 %v674, %v671
    %v840 = vpack.c.b16 %v675, %v672
    %v841 = vpack.c.b16 %v676, %v673
    %v842 = vpack.c.b16 %v680, %v677
    %v843 = vpack.c.b16 %v681, %v678
    %v844 = vpack.c.b16 %v682, %v679
    %v845 = vpack.c.b16 %v686, %v683
    %v846 = vpack.c.b16 %v687, %v684
    %v847 = vpack.c.b16 %v688, %v685
    %v848 = vpack.c.b16 %v692, %v689
    %v849 = vpack.c.b16 %v693, %v690
    %v850 = vpack.c.b16 %v694, %v691
    %v851 = vpack.c.b16 %v698, %v695
    %v852 = vpack.c.b16 %v699, %v696
    %v853 = vpack.c.b16 %v700, %v697
    %v854 = vpack.c.b16 %v704, %v701
    %v855 = vpack.c.b16 %v705, %v702
    %v856 = vpack.c.b16 %v706, %v703
    %v857 = vpack.c.b16 %v710, %v707
    %v858 = vpack.c.b16 %v711, %v708
    %v859 = vpack.c.b16 %v712, %v709
    %v860 = vpack.c.b16 %v716, %v713
    %v861 = vpack.c.b16 %v717, %v714
    %v862 = vpack.c.b16 %v718, %v715
    %v863 = vpack.c.b16 %v722, %v719
    %v864 = vpack.c.b16 %v723, %v720
    %v865 = vpack.c.b16 %v724, %v721
    %v866 = vpack.c.b16 %v728, %v725
    %v867 = vpack.c.b16 %v729, %v726
    %v868 = vpack.c.b16 %v730, %v727
    %v869 = vpack.c.b16 %v734, %v731
    %v870 = vpack.c.b16 %v735, %v732
    %v871 = vpack.c.b16 %v736, %v733
    %v872 = vpack.c.b16 %v740, %v737
    %v873 = vpack.c.b16 %v741, %v738
    %v874 = vpack.c.b16 %v742, %v739
    %v875 = vpack.c.b16 %v746, %v743
    %v876 = vpack.c.b16 %v747, %v744
    %v877 = vpack.c.b16 %v748, %v745
    %v878 = vpack.c.b16 %v752, %v749
    %v879 = vpack.c.b16 %v753, %v750
    %v880 = vpack.c.b16 %v754, %v751
    %v881 = vpack.c.b16 %v758, %v755
    %v882 = vpack.c.b16 %v759, %v756
    %v883 = vpack.c.b16 %v760, %v757
    %v884 = vpack.c.b16 %v764, %v761
    %v885 = vpack.c.b16 %v765, %v762
    %v886 = vpack.c.b16 %v766, %v763
    %v887 = vpack.c.b16 %v770, %v767
    %v888 = vpack.c.b16 %v771, %v768
    %v889 = vpack.c.b16 %v772, %v769
    %v890 = vpack.c.b16 %v776, %v773
    %v891 = vpack.c.b16 %v777, %v774
    %v892 = vpack.c.b16 %v778, %v775
    %v893 = vpack.c.b16 %v782, %v779
    %v894 = vpack.c.b16 %v783, %v780
    %v895 = vpack.c.b16 %v784, %v781
    %v896 = vpack.c.b16 %v788, %v785
    %v897 = vpack.c.b16 %v789, %v786
    %v898 = vpack.c.b16 %v790, %v787
    %v899 = vpack.c.b16 %v794, %v791
    %v900 = vpack.c.b16 %v795, %v792
    %v901 = vpack.c.b16 %v796, %v793
    %v902 = vpack.c.b16 %v800, %v797
    %v903 = vpack.c.b16 %v801, %v798
    %v904 = vpack.c.b16 %v802, %v799
    %v905 = vpack.c.b16 %v806, %v803
    %v906 = vpack.c.b16 %v807, %v804
    %v907 = vpack.c.b16 %v808, %v805
    %v908 = vpack.c.b16 %v812, %v809
    %v909 = vpack.c.b16 %v813, %v810
    %v910 = vpack.c.b16 %v814, %v811
    %1007 = vmatprep.subr.bf16.mxu0 %v816
    %1008 = vmatpush1.bf16.msra.mxu0 %v815
    %1009 = vmatprep.subr.bf16.mxu0 %v819
    %1010 = vmatpush1.bf16.msra.mxu0 %v818
    %1011 = vmatprep.subr.bf16.mxu0 %v822
    %1012 = vmatpush1.bf16.msra.mxu0 %v821
    %1013 = vmatprep.subr.bf16.mxu0 %v825
    %1014 = vmatpush1.bf16.msra.mxu0 %v824
    %1015 = vmatprep.subr.bf16.mxu0 %v828
    %1016 = vmatpush1.bf16.msra.mxu0 %v827
    %1017 = vmatprep.subr.bf16.mxu0 %v831
    %1018 = vmatpush1.bf16.msra.mxu0 %v830
    %1019 = vmatprep.subr.bf16.mxu0 %v834
    %1020 = vmatpush1.bf16.msra.mxu0 %v833
    %1021 = vmatprep.subr.bf16.mxu0 %v837
    %1022 = vmatpush1.bf16.msra.mxu0 %v836
    %1023 = vmatprep.subr.bf16.mxu0 %v840
    %1024 = vmatpush1.bf16.msra.mxu0 %v839
    %1025 = vmatprep.subr.bf16.mxu0 %v843
    %1026 = vmatpush1.bf16.msra.mxu0 %v842
    %1027 = vmatprep.subr.bf16.mxu0 %v846
    %1028 = vmatpush1.bf16.msra.mxu0 %v845
    %1029 = vmatprep.subr.bf16.mxu0 %v849
    %1030 = vmatpush1.bf16.msra.mxu0 %v848
    %1031 = vmatprep.subr.bf16.mxu0 %v852
    %1032 = vmatpush1.bf16.msra.mxu0 %v851
    %1033 = vmatprep.subr.bf16.mxu0 %v855
    %1034 = vmatpush1.bf16.msra.mxu0 %v854
    %1035 = vmatprep.subr.bf16.mxu0 %v858
    %1036 = vmatpush1.bf16.msra.mxu0 %v857
    %1037 = vmatprep.subr.bf16.mxu0 %v861
    %1038 = vmatpush1.bf16.msra.mxu0 %v860
    %1039 = vmatprep.mubr.bf16.mxu0 %v259
    %1040 = vmatmul.mubr.bf16.gmra.mrb[0].mxu0 %v258
    %v1041 = vpop.f32.mrb[0].mxu0
    %v1042 = vadd.f32 %v449, %v1041
    %v1043 = vpop.f32.mrb[0].mxu0
    %v1044 = vadd.f32 %v451, %v1043
    %v1045 = vpop.f32.mrb[0].mxu0
    %v1046 = vpop.f32.mrb[0].mxu0
    %1047 = vdwg.mxu0
    %1048 = vmatprep.subr.bf16.mxu0 %v864
    %1049 = vmatpush1.bf16.msra.mxu0 %v863
    %1050 = vmatprep.subr.bf16.mxu0 %v867
    %1051 = vmatpush1.bf16.msra.mxu0 %v866
    %1052 = vmatprep.subr.bf16.mxu0 %v870
    %1053 = vmatpush1.bf16.msra.mxu0 %v869
    %1054 = vmatprep.subr.bf16.mxu0 %v873
    %1055 = vmatpush1.bf16.msra.mxu0 %v872
    %1056 = vmatprep.subr.bf16.mxu0 %v876
    %1057 = vmatpush1.bf16.msra.mxu0 %v875
    %1058 = vmatprep.subr.bf16.mxu0 %v879
    %1059 = vmatpush1.bf16.msra.mxu0 %v878
    %1060 = vmatprep.subr.bf16.mxu0 %v882
    %1061 = vmatpush1.bf16.msra.mxu0 %v881
    %1062 = vmatprep.subr.bf16.mxu0 %v885
    %1063 = vmatpush1.bf16.msra.mxu0 %v884
    %1064 = vmatprep.subr.bf16.mxu0 %v888
    %1065 = vmatpush1.bf16.msra.mxu0 %v887
    %1066 = vmatprep.subr.bf16.mxu0 %v891
    %1067 = vmatpush1.bf16.msra.mxu0 %v890
    %1068 = vmatprep.subr.bf16.mxu0 %v894
    %1069 = vmatpush1.bf16.msra.mxu0 %v893
    %1070 = vmatprep.subr.bf16.mxu0 %v897
    %1071 = vmatpush1.bf16.msra.mxu0 %v896
    %1072 = vmatprep.subr.bf16.mxu0 %v900
    %1073 = vmatpush1.bf16.msra.mxu0 %v899
    %1074 = vmatprep.subr.bf16.mxu0 %v903
    %1075 = vmatpush1.bf16.msra.mxu0 %v902
    %1076 = vmatprep.subr.bf16.mxu0 %v906
    %1077 = vmatpush1.bf16.msra.mxu0 %v905
    %1078 = vmatprep.subr.bf16.mxu0 %v909
    %1079 = vmatpush1.bf16.msra.mxu0 %v908
    %1080 = vmatprep.mubr.bf16.mxu0 %v261
    %1081 = vmatmul.mubr.bf16.gmra.mrb[0].mxu0 %v260
    %v1082 = vpop.f32.mrb[0].mxu0
    %v1083 = vadd.f32 %v1042, %v1082
    %v1084 = vpop.f32.mrb[0].mxu0
    %v1085 = vadd.f32 %v1044, %v1084
    %v1086 = vpop.f32.mrb[0].mxu0
    %v1087 = vpop.f32.mrb[0].mxu0
    %1088 = vdwg.mxu0
    %1089 = vmatprep.subr.bf16.mxu0 0
    %1090 = vmatpush1.bf16.msra.mxu0 %v817
    %1091 = vmatprep.subr.bf16.mxu0 0
    %1092 = vmatpush1.bf16.msra.mxu0 %v820
    %1093 = vmatprep.subr.bf16.mxu0 0
    %1094 = vmatpush1.bf16.msra.mxu0 %v823
    %1095 = vmatprep.subr.bf16.mxu0 0
    %1096 = vmatpush1.bf16.msra.mxu0 %v826
    %1097 = vmatprep.subr.bf16.mxu0 0
    %1098 = vmatpush1.bf16.msra.mxu0 %v829
    %1099 = vmatprep.subr.bf16.mxu0 0
    %1100 = vmatpush1.bf16.msra.mxu0 %v832
    %1101 = vmatprep.subr.bf16.mxu0 0
    %1102 = vmatpush1.bf16.msra.mxu0 %v835
    %1103 = vmatprep.subr.bf16.mxu0 0
    %1104 = vmatpush1.bf16.msra.mxu0 %v838
    %1105 = vmatprep.subr.bf16.mxu0 0
    %1106 = vmatpush1.bf16.msra.mxu0 %v841
    %1107 = vmatprep.subr.bf16.mxu0 0
    %1108 = vmatpush1.bf16.msra.mxu0 %v844
    %1109 = vmatprep.subr.bf16.mxu0 0
    %1110 = vmatpush1.bf16.msra.mxu0 %v847
    %1111 = vmatprep.subr.bf16.mxu0 0
    %1112 = vmatpush1.bf16.msra.mxu0 %v850
    %1113 = vmatprep.subr.bf16.mxu0 0
    %1114 = vmatpush1.bf16.msra.mxu0 %v853
    %1115 = vmatprep.subr.bf16.mxu0 0
    %1116 = vmatpush1.bf16.msra.mxu0 %v856
    %1117 = vmatprep.subr.bf16.mxu0 0
    %1118 = vmatpush1.bf16.msra.mxu0 %v859
    %1119 = vmatprep.subr.bf16.mxu0 0
    %1120 = vmatpush1.bf16.msra.mxu0 %v862
    %1121 = vmatprep.mubr.bf16.mxu0 %v259
    %1122 = vmatmul.mubr.bf16.gmra.mrb[0].mxu0 %v258
    %v1123 = vpop.f32.mrb[0].mxu0
    %v1124 = vadd.f32 %v490, %v1123
    %v1125 = vpop.f32.mrb[0].mxu0
    %v1126 = vpop.f32.mrb[0].mxu0
    %v1127 = vpop.f32.mrb[0].mxu0
    %1128 = vdwg.mxu0
    %1129 = vmatprep.subr.bf16.mxu0 0
    %1130 = vmatpush1.bf16.msra.mxu0 %v865
    %1131 = vmatprep.subr.bf16.mxu0 0
    %1132 = vmatpush1.bf16.msra.mxu0 %v868
    %1133 = vmatprep.subr.bf16.mxu0 0
    %1134 = vmatpush1.bf16.msra.mxu0 %v871
    %1135 = vmatprep.subr.bf16.mxu0 0
    %1136 = vmatpush1.bf16.msra.mxu0 %v874
    %1137 = vmatprep.subr.bf16.mxu0 0
    %1138 = vmatpush1.bf16.msra.mxu0 %v877
    %1139 = vmatprep.subr.bf16.mxu0 0
    %1140 = vmatpush1.bf16.msra.mxu0 %v880
    %1141 = vmatprep.subr.bf16.mxu0 0
    %1142 = vmatpush1.bf16.msra.mxu0 %v883
    %1143 = vmatprep.subr.bf16.mxu0 0
    %1144 = vmatpush1.bf16.msra.mxu0 %v886
    %1145 = vmatprep.subr.bf16.mxu0 0
    %1146 = vmatpush1.bf16.msra.mxu0 %v889
    %1147 = vmatprep.subr.bf16.mxu0 0
    %1148 = vmatpush1.bf16.msra.mxu0 %v892
    %1149 = vmatprep.subr.bf16.mxu0 0
    %1150 = vmatpush1.bf16.msra.mxu0 %v895
    %1151 = vmatprep.subr.bf16.mxu0 0
    %1152 = vmatpush1.bf16.msra.mxu0 %v898
    %1153 = vmatprep.subr.bf16.mxu0 0
    %1154 = vmatpush1.bf16.msra.mxu0 %v901
    %1155 = vmatprep.subr.bf16.mxu0 0
    %1156 = vmatpush1.bf16.msra.mxu0 %v904
    %1157 = vmatprep.subr.bf16.mxu0 0
    %1158 = vmatpush1.bf16.msra.mxu0 %v907
    %1159 = vmatprep.subr.bf16.mxu0 0
    %1160 = vmatpush1.bf16.msra.mxu0 %v910
    %1161 = vmatprep.mubr.bf16.mxu0 %v261
    %1162 = vmatmul.mubr.bf16.gmra.mrb[0].mxu0 %v260
    %v1163 = vpop.f32.mrb[0].mxu0
    %v1164 = vadd.f32 %v1124, %v1163
    %v1165 = vpop.f32.mrb[0].mxu0
    %v1166 = vpop.f32.mrb[0].mxu0
    %v1167 = vpop.f32.mrb[0].mxu0
    %1168 = vdwg.mxu0
    %v1169 = vld [vmem:[%s6] sm:$0x7]
    %v1171 = vlaneseq
    %v1172 = vshrl.u32 %v1171, 7
    %v1173 = vsub.s32 0, %v1172
    %v1174 = vrot.slane %v1169, %v1173
    %v1175 = vlaneseq
    %v1176 = vshrl.u32 %v1175, 7
    %v1177 = vsub.s32 1, %v1176
    %v1178 = vrot.slane %v1169, %v1177
    %v1179 = vlaneseq
    %v1180 = vshrl.u32 %v1179, 7
    %v1181 = vsub.s32 2, %v1180
    %v1182 = vrot.slane %v1169, %v1181
    %v1186 = vadd.f32 %v1083, %v1174
    %v1187 = vadd.f32 %v1085, %v1178
    %v1188 = vadd.f32 %v1164, %v1182
    %v1189 = vmax.f32 %v1186, 0.0
    %v1190 = vmax.f32 %v1187, 0.0
    %v1191 = vmax.f32 %v1188, 0.0
    %v1192 = vld [vmem:[%s7] sm:$0x7]
    %v1194 = vlaneseq
    %v1195 = vshrl.u32 %v1194, 7
    %v1196 = vsub.s32 0, %v1195
    %v1197 = vrot.slane %v1192, %v1196
    %v1198 = vlaneseq
    %v1199 = vshrl.u32 %v1198, 7
    %v1200 = vsub.s32 1, %v1199
    %v1201 = vrot.slane %v1192, %v1200
    %v1202 = vlaneseq
    %v1203 = vshrl.u32 %v1202, 7
    %v1204 = vsub.s32 2, %v1203
    %v1205 = vrot.slane %v1192, %v1204
    %v1209 = vmul.f32 %v1189, %v1197
    %v1210 = vmul.f32 %v1190, %v1201
    %v1211 = vmul.f32 %v1191, %v1205
    %v1212 = vadd.f32 %v1209, %v1210
    %v1213 = vadd.f32 %v1212, %v1211
    %1214 = vadd.xlane.f32.xlu0 %v1213
    %v1215 = vpop.xlane.xlu0 %1214
    %s1216 = sld [smem:[#allocation2]]
    %v1217 = vstv %s1216
    %v1218 = vadd.f32 %v1215, %v1217
    %vm1219 = vcmask 7168
    %1220 = vst.msk [vmem:[%s9] sm:$0xff] %vm1219, %v1218
    // Predicated region
    $region54: #{ddpg_critic.1} parent=1 // pred_check
      _
    $region55: #{ddpg_critic.1} parent=1 // pred_check_branch
      %1222 = sbr.rel (0) target = $region57
    $region56: #{ddpg_critic.1} parent=1 // pred_region
      _
    $region57: #{ddpg_critic.1} parent=1 // pred_fallthru
      _
    // Predicated region
    $region58: #{ddpg_critic.1} parent=1 // pred_check
      _
    $region59: #{ddpg_critic.1} parent=1 // pred_check_branch
      %1224 = sbr.rel (0) target = $region61
    $region60: #{ddpg_critic.1} parent=1 // pred_region
      _
    $region61: #{ddpg_critic.1} parent=1 // pred_fallthru
      _
    %1225 = vsyncpa [#allocation4], 1
    %1226 = vsyncpa [#allocation6], 1
    %1227 = vsyncpa [#allocation9], 1

</llo_original>
